<compile_context>
chip_gen: v6e
topology: v6e:2x2x1
jax: 0.10.0
libtpu: 0.0.40
codegen_flags: <defaults>
</compile_context>

<pallas_src>
import jax
import jax.numpy as jnp
from jax.experimental import pallas as pl
from jax.experimental.pallas import tpu as pltpu


def _round_up(n, m):
    return ((n + m - 1) // m) * m


def _mlp_kernel(x_ref, w1_ref, b1_ref, w2_ref, b2_ref, o_ref):
    # Stage 1: hidden = relu(x @ W1 + b1).  MXU matmul, f32 accumulation,
    # bias + ReLU on the VPU in f32.
    h = jnp.dot(x_ref[...], w1_ref[...], preferred_element_type=jnp.float32)
    h = jnp.maximum(h + b1_ref[...], 0.0)                 # (block_b, Hp) f32

    # Stage 2: out = hidden @ W2 + b2, with N == 1.  Instead of a second MXU
    # pass that uses one column, do VPU multiply + XLU lane reduction; the
    # result is then stored lane-dense as a (1, block_b) row.
    col = jnp.sum(h * w2_ref[...], axis=-1)               # (block_b,)
    o_ref[...] = col[None, :] + b2_ref[...]               # (1, block_b) f32


def fit_model_forward(x, w1, b1, w2, b2, *, block_b=None, use_bf16=False):
    """Forward pass of FitModel.

    x:  [B, F] float32
    w1: [F, H] float32   (transposed PyTorch layout: x @ w1)
    b1: [1, H] or [H]
    w2: [H, 1] or [H]
    b2: [1, 1] or scalar
    returns: [B, 1] float32
    """
    x = jnp.asarray(x, jnp.float32)
    B, F = x.shape
    H = w1.shape[1]

    # ---- parameter prep (layout plumbing in the wrapper) ------------------
    w1 = jnp.asarray(w1, jnp.float32)
    b1 = jnp.asarray(b1, jnp.float32).reshape(1, H)
    w2_row = jnp.asarray(w2, jnp.float32).reshape(1, H)
    b2 = jnp.asarray(b2, jnp.float32).reshape(1, 1)

    # Zero-pad the hidden dim to a multiple of 128 (full vregs / MXU columns).
    Hp = _round_up(H, 128)
    if Hp != H:
        w1 = jnp.pad(w1, ((0, 0), (0, Hp - H)))
        b1 = jnp.pad(b1, ((0, 0), (0, Hp - H)))
        w2_row = jnp.pad(w2_row, ((0, 0), (0, Hp - H)))   # zero rows -> exact math

    # ---- batch tiling ------------------------------------------------------
    if block_b is None:
        block_b = 512                       # ~85% of HBM roofline; many grid steps
    if block_b >= B:
        block_b = B                         # single grid step: full-dim blocks
        B_padded = B
    else:
        block_b = max(128, (block_b // 128) * 128)   # lane-dense output tiles
        B_padded = _round_up(B, block_b)

    if B_padded != B:
        x = jnp.pad(x, ((0, B_padded - B), (0, 0)))

    # Optional bf16 cast of matmul operands only (halves HBM bytes, MXU-native
    # on v6e/v7x).  Bias / ReLU / accumulation remain f32.
    if use_bf16:
        x = x.astype(jnp.bfloat16)
        w1 = w1.astype(jnp.bfloat16)

    grid = (B_padded // block_b,)

    # ---- explicit VMEM budget (v5e 16 MiB / v6e-v7x 32 MiB scoped defaults) --
    x_item = jnp.dtype(x.dtype).itemsize
    vmem_needed = (
        2 * block_b * F * x_item          # x tile, double-buffered
        + 2 * block_b * 4                 # (1, block_b) out tile, double-buffered
        + 2 * F * Hp * x_item             # W1 (resident; budget 2x)
        + 2 * 3 * Hp * 4                  # b1, w2_row, b2
        + block_b * Hp * 4                # hidden activation h (f32)
    )
    vmem_limit = int(min(max(2 * vmem_needed, 8 * 1024 * 1024), 64 * 1024 * 1024))

    cost = pl.CostEstimate(
        flops=2 * B_padded * F * Hp + 4 * B_padded * Hp,
        transcendentals=0,
        bytes_accessed=(B_padded * F * x_item + F * Hp * x_item
                        + 3 * Hp * 4 + B_padded * 4),
    )

    out_row = pl.pallas_call(
        _mlp_kernel,
        out_shape=jax.ShapeDtypeStruct((1, B_padded), jnp.float32),
        grid_spec=pl.GridSpec(
            grid=grid,
            in_specs=[
                pl.BlockSpec((block_b, F), lambda i: (i, 0)),   # x tile (streamed)
                pl.BlockSpec((F, Hp), lambda i: (0, 0)),        # W1 (resident)
                pl.BlockSpec((1, Hp), lambda i: (0, 0)),        # b1
                pl.BlockSpec((1, Hp), lambda i: (0, 0)),        # w2 as a row
                pl.BlockSpec((1, 1), lambda i: (0, 0)),         # b2
            ],
            out_specs=pl.BlockSpec((1, block_b), lambda i: (0, i)),  # lane-dense
        ),
        compiler_params=pltpu.CompilerParams(
            dimension_semantics=("parallel",),   # shard batch tiles across TCs (v7x)
            vmem_limit_bytes=vmem_limit,
        ),
        cost_estimate=cost,
    )(x, w1, b1, w2_row, b2)

    # Back to the PyTorch output layout [B, 1].
    return out_row[0, :B].reshape(B, 1)


def make_params(key, n_features, num_units):
    """Deterministic init mimicking torch.nn.Linear default (uniform +-1/sqrt(fan_in))."""
    k1, k2, k3, k4 = jax.random.split(key, 4)
    bound1 = 1.0 / jnp.sqrt(n_features)
    bound2 = 1.0 / jnp.sqrt(num_units)
    w1 = jax.random.uniform(k1, (n_features, num_units), jnp.float32, -bound1, bound1)
    b1 = jax.random.uniform(k2, (1, num_units), jnp.float32, -bound1, bound1)
    w2 = jax.random.uniform(k3, (num_units, 1), jnp.float32, -bound2, bound2)
    b2 = jax.random.uniform(k4, (1, 1), jnp.float32, -bound2, bound2)
    return w1, b1, w2, b2


if __name__ == "__main__":
    batch = 8
    n_features = 32
    num_units = 32

    key = jax.random.PRNGKey(0)
    kx, kp = jax.random.split(key)
    x = jax.random.normal(kx, (batch, n_features), jnp.float32)
    w1, b1, w2, b2 = make_params(kp, n_features, num_units)

    # Small single-tile case (matches the module's stated sizes).
    out = jax.block_until_ready(fit_model_forward(x, w1, b1, w2, b2))
    ref = jnp.maximum(x @ w1 + b1, 0.0) @ w2 + b2
    assert out.shape == (batch, 1)
    assert jnp.allclose(out, ref, atol=1e-5, rtol=1e-5)

    # Multi-tile case with a non-divisible batch (exercises padding + grid > 1).
    B2 = 300
    x2 = jax.random.normal(jax.random.PRNGKey(1), (B2, n_features), jnp.float32)
    ref2 = jnp.maximum(x2 @ w1 + b1, 0.0) @ w2 + b2
    out2 = jax.block_until_ready(fit_model_forward(x2, w1, b1, w2, b2, block_b=128))
    assert out2.shape == (B2, 1)
    assert jnp.allclose(out2, ref2, atol=1e-5, rtol=1e-5)

    # bf16 matmul-operand path (v6e/v7x HBM-traffic optimization), f32 accumulation.
    out3 = jax.block_until_ready(
        fit_model_forward(x2, w1, b1, w2, b2, block_b=128, use_bf16=True))
    assert jnp.allclose(out3, ref2, atol=5e-2, rtol=5e-2)

    print("KERNEL_OK")
</pallas_src>

<mosaic_0001>
module attributes {stable_mosaic.version = 11 : i64} {
  func.func @_mlp_kernel(%arg0: i32, %arg1: memref<8x32xf32, #tpu.memory_space<vmem>>, %arg2: memref<32x128xf32, #tpu.memory_space<vmem>>, %arg3: memref<1x128xf32, #tpu.memory_space<vmem>>, %arg4: memref<1x128xf32, #tpu.memory_space<vmem>>, %arg5: memref<1x1xf32, #tpu.memory_space<vmem>>, %arg6: memref<1x8xf32, #tpu.memory_space<vmem>>) attributes {dimension_semantics = [#tpu.dimension_semantics<parallel>], iteration_bounds = array<i64: 1>, scalar_prefetch = 0 : i64, scratch_operands = 0 : i64, tpu.core_type = #tpu.core_type<tc>, window_params = [{transform_indices = @transform_0, window_bounds = array<i64: 8, 32>}, {pipeline_mode = #tpu.pipeline_mode<synchronous>, transform_indices = @transform_1, window_bounds = array<i64: 32, 128>}, {pipeline_mode = #tpu.pipeline_mode<synchronous>, transform_indices = @transform_2, window_bounds = array<i64: 1, 128>}, {pipeline_mode = #tpu.pipeline_mode<synchronous>, transform_indices = @transform_3, window_bounds = array<i64: 1, 128>}, {pipeline_mode = #tpu.pipeline_mode<synchronous>, transform_indices = @transform_4, window_bounds = array<i64: 1, 1>}, {transform_indices = @transform_5, window_bounds = array<i64: 1, 8>}]} {
    %c0 = arith.constant 0 : index
    %c0_0 = arith.constant 0 : index
    %0 = vector.load %arg1[%c0, %c0_0] : memref<8x32xf32, #tpu.memory_space<vmem>>, vector<8x32xf32>
    %c0_1 = arith.constant 0 : index
    %c0_2 = arith.constant 0 : index
    %1 = vector.load %arg2[%c0_1, %c0_2] : memref<32x128xf32, #tpu.memory_space<vmem>>, vector<32x128xf32>
    %cst = arith.constant dense<0.000000e+00> : vector<8x128xf32>
    %2 = tpu.matmul %0, %1, %cst {dimension_numbers = #tpu.dot_dimension_numbers<[1], [0], [0], [1], [0, 0, 1, 1], [], []>} : vector<8x32xf32>, vector<32x128xf32>, vector<8x128xf32> -> vector<8x128xf32>
    %c0_3 = arith.constant 0 : index
    %c0_4 = arith.constant 0 : index
    %3 = vector.load %arg3[%c0_3, %c0_4] : memref<1x128xf32, #tpu.memory_space<vmem>>, vector<1x128xf32>
    %4 = vector.broadcast %3 : vector<1x128xf32> to vector<8x128xf32>
    %5 = arith.addf %2, %4 : vector<8x128xf32>
    %cst_5 = arith.constant 0.000000e+00 : f32
    %6 = vector.broadcast %cst_5 : f32 to vector<8x128xf32>
    %7 = arith.maximumf %5, %6 : vector<8x128xf32>
    %c0_6 = arith.constant 0 : index
    %c0_7 = arith.constant 0 : index
    %8 = vector.load %arg4[%c0_6, %c0_7] : memref<1x128xf32, #tpu.memory_space<vmem>>, vector<1x128xf32>
    %9 = vector.broadcast %8 : vector<1x128xf32> to vector<8x128xf32>
    %10 = arith.mulf %7, %9 : vector<8x128xf32>
    %cst_8 = arith.constant dense<0.000000e+00> : vector<8xf32>
    %11 = vector.multi_reduction <add>, %10, %cst_8 [1] : vector<8x128xf32> to vector<8xf32>
    %12 = vector.shape_cast %11 : vector<8xf32> to vector<1x8xf32>
    %c0_9 = arith.constant 0 : index
    %c0_10 = arith.constant 0 : index
    %13 = vector.load %arg5[%c0_9, %c0_10] : memref<1x1xf32, #tpu.memory_space<vmem>>, vector<1x1xf32>
    %14 = vector.broadcast %13 : vector<1x1xf32> to vector<1x8xf32>
    %15 = arith.addf %12, %14 : vector<1x8xf32>
    %c0_11 = arith.constant 0 : index
    %c0_12 = arith.constant 0 : index
    %16 = vector.load %arg6[%c0_11, %c0_12] : memref<1x8xf32, #tpu.memory_space<vmem>>, vector<1x8xf32>
    tpu.vector_store %arg6[%c0_11, %c0_12], %15 {strides = array<i32>} : memref<1x8xf32, #tpu.memory_space<vmem>>, vector<1x8xf32>,
    return
  }
  func.func @transform_0(%arg0: i32) -> (i32, i32) {
    %c0_i32 = arith.constant 0 : i32
    %c0_i32_0 = arith.constant 0 : i32
    return %arg0, %c0_i32 : i32, i32
  }
  func.func @transform_1(%arg0: i32) -> (i32, i32) {
    %c0_i32 = arith.constant 0 : i32
    %c0_i32_0 = arith.constant 0 : i32
    %c0_i32_1 = arith.constant 0 : i32
    return %c0_i32, %c0_i32_0 : i32, i32
  }
  func.func @transform_2(%arg0: i32) -> (i32, i32) {
    %c0_i32 = arith.constant 0 : i32
    %c0_i32_0 = arith.constant 0 : i32
    %c0_i32_1 = arith.constant 0 : i32
    return %c0_i32, %c0_i32_0 : i32, i32
  }
  func.func @transform_3(%arg0: i32) -> (i32, i32) {
    %c0_i32 = arith.constant 0 : i32
    %c0_i32_0 = arith.constant 0 : i32
    %c0_i32_1 = arith.constant 0 : i32
    return %c0_i32, %c0_i32_0 : i32, i32
  }
  func.func @transform_4(%arg0: i32) -> (i32, i32) {
    %c0_i32 = arith.constant 0 : i32
    %c0_i32_0 = arith.constant 0 : i32
    %c0_i32_1 = arith.constant 0 : i32
    return %c0_i32, %c0_i32_0 : i32, i32
  }
  func.func @transform_5(%arg0: i32) -> (i32, i32) {
    %c0_i32 = arith.constant 0 : i32
    %c0_i32_0 = arith.constant 0 : i32
    return %c0_i32, %arg0 : i32, i32
  }
}

</mosaic_0001>

<llo_original>
// kernel: tpu_custom_call.1
$region0: #{tpu_custom_call.1}
  #allocation0 [shape = 'u32[]', space=smem, size = 0x4, offset = 0x4, fixed_abs, tag = 'smem constant byte address 0x4 - core index']
  #allocation1 [shape = 'u32[144,128]{1,0:T(1,128)}', space=vmem, size = 0x12000, scoped, tag = 'internal scratch']
  #allocation2 [shape = 'f32[1,1]{1,0:T(1,128)S(1)}', space=vmem, size = 0x200, scoped, tag = 'scoped memory for tpu_custom_call.1']
  %s0 = inlined_call_operand.hbm [shape: f32[8,32], index: 0, kind: input, shape index: {}]
  %s1 = inlined_call_operand.hbm [shape: f32[32,128], index: 1, kind: input, shape index: {}]
  %s2 = inlined_call_operand.vmem [shape: f32[1,128], index: 2, kind: input, shape index: {}]
  %s3 = inlined_call_operand.vmem [shape: f32[1,128], index: 3, kind: input, shape index: {}]
  %s4 = inlined_call_operand.<no memory space> [shape: f32[1,1], index: 4, kind: input, shape index: {}]
  %s5 = inlined_call_operand.hbm [shape: f32[1,8], index: 5, kind: output, shape index: {}]
  %s6 = sld [smem:[#allocation0]]
  $region38: #{tpu_custom_call.1} parent=0
    _
  %s8 = ssub.s32 1, %s6
  %s9 = scalar_select 0, %s8, %s6
  %v10 = vstv %s4
  %11 = vst [vmem:[#allocation2] sm:$0x1] %v10
  $region1: #{tpu_custom_call.1} parent=0
    #allocation3 [shape = 'u8[4096]{0}', space=vmem, size = 0x1000, scoped, tag = 'input window, operand 0, single buffered']
    #allocation4 [shape = 's32[1]{0}', space=sflag, size = 0x4, scoped, tag = 'scoped memory for tpu_custom_call.1']
    #allocation5 [shape = 's32[1]{0}', space=sflag, size = 0x4, scoped, tag = 'scoped memory for tpu_custom_call.1']
    #allocation6 [shape = 'u8[16384]{0}', space=vmem, size = 0x4000, scoped, tag = 'input window, operand 1, single buffered']
    #allocation7 [shape = 's32[1]{0}', space=sflag, size = 0x4, scoped, tag = 'scoped memory for tpu_custom_call.1']
    #allocation8 [shape = 'u8[512]{0}', space=vmem, size = 0x400, scoped, tag = 'output window, operand 0, single buffered']
    %12 = vsyncpa [#allocation4], 0
    %13 = vsyncpa [#allocation7], 0
    %14 = vsyncpa [#allocation5], 0
    // Predicated region
    $region2: #{tpu_custom_call.1} parent=1 // pred_check
      _
    $region3: #{tpu_custom_call.1} parent=1 // pred_check_branch
      %16 = sbr.rel (0) target = $region5
    $region4: #{tpu_custom_call.1} parent=1 // pred_region
      %s18 = ssub.s32 128, 128
      %19 = vsyncadd [#allocation4], %s18
      %s21 = sshll.u32 [#allocation3], 4
      %s22 = int_to_ptr.vmem [resolvable:$true] %s21
      %24 = dma.hbm_to_vmem [thread:$0]  %s0, 128, %s22, [#allocation4]
    $region5: #{tpu_custom_call.1} parent=1 // pred_fallthru
      _
    // Predicated region
    $region6: #{tpu_custom_call.1} parent=1 // pred_check
      _
    $region7: #{tpu_custom_call.1} parent=1 // pred_check_branch
      %26 = sbr.rel (0) target = $region9
    $region8: #{tpu_custom_call.1} parent=1 // pred_region
      %s28 = ssub.s32 512, 512
      %29 = vsyncadd [#allocation7], %s28
      %s30 = sshll.u32 [#allocation6], 4
      %s31 = int_to_ptr.vmem [resolvable:$true] %s30
      %36 = dma.hbm_to_vmem [thread:$0]  %s1, 512, %s31, [#allocation7], 128, 128, 8
    $region9: #{tpu_custom_call.1} parent=1 // pred_fallthru
      _
    // Predicated region
    $region10: #{tpu_custom_call.1} parent=1 // pred_check
      _
    $region11: #{tpu_custom_call.1} parent=1 // pred_check_branch
      %38 = sbr.rel (0) target = $region13
    $region12: #{tpu_custom_call.1} parent=1 // pred_region
      _
    $region13: #{tpu_custom_call.1} parent=1 // pred_fallthru
      _
    // Predicated region
    $region14: #{tpu_custom_call.1} parent=1 // pred_check
      _
    $region15: #{tpu_custom_call.1} parent=1 // pred_check_branch
      %40 = sbr.rel (0) target = $region17
    $region16: #{tpu_custom_call.1} parent=1 // pred_region
      _
    $region17: #{tpu_custom_call.1} parent=1 // pred_fallthru
      _
    // Predicated region
    $region18: #{tpu_custom_call.1} parent=1 // pred_check
      _
    $region19: #{tpu_custom_call.1} parent=1 // pred_check_branch
      %42 = sbr.rel (0) target = $region21
    $region20: #{tpu_custom_call.1} parent=1 // pred_region
      _
    $region21: #{tpu_custom_call.1} parent=1 // pred_fallthru
      _
    // Predicated region
    $region22: #{tpu_custom_call.1} parent=1 // pred_check
      _
    $region23: #{tpu_custom_call.1} parent=1 // pred_check_branch
      %44 = sbr.rel (0) target = $region25
    $region24: #{tpu_custom_call.1} parent=1 // pred_region
      %45 = dma.done [#allocation4], 128
    $region25: #{tpu_custom_call.1} parent=1 // pred_fallthru
      _
    // Predicated region
    $region26: #{tpu_custom_call.1} parent=1 // pred_check
      _
    $region27: #{tpu_custom_call.1} parent=1 // pred_check_branch
      %47 = sbr.rel (0) target = $region29
    $region28: #{tpu_custom_call.1} parent=1 // pred_region
      %48 = dma.done [#allocation7], 512
    $region29: #{tpu_custom_call.1} parent=1 // pred_fallthru
      _
    %v49 = vld [vmem:[#allocation3] sm:$0xff]
    %v50 = vld [vmem:[#allocation6] sm:$0xff]
    %v51 = vld [vmem:[#allocation6 + $0x8] sm:$0xff]
    %v52 = vld [vmem:[#allocation6 + $0x10] sm:$0xff]
    %v53 = vld [vmem:[#allocation6 + $0x18] sm:$0xff]
    %v54 = vld [vmem:[%s2] sm:$0x1]
    %v56 = vlaneseq
    %v57 = vshrl.u32 %v56, 7
    %v58 = vsub.s32 0, %v57
    %v59 = vrot.slane %v54, %v58
    %vm61 = vcmask 261120
    %v63 = vsel %vm61, %v49, 0
    %65 = vmatprep.subr.mxu0 0.0
    %66 = vmatpush1.msra.mxu0 0.0
    %67 = vmatprep.subr.mxu0 0.0
    %68 = vmatpush1.msra.mxu0 0.0
    %69 = vmatprep.subr.mxu0 0.0
    %70 = vmatpush1.msra.mxu0 0.0
    %71 = vmatprep.subr.mxu0 0.0
    %72 = vmatpush1.msra.mxu0 0.0
    %73 = vmatprep.subr.mxu0 0.0
    %74 = vmatpush1.msra.mxu0 0.0
    %75 = vmatprep.subr.mxu0 0.0
    %76 = vmatpush1.msra.mxu0 0.0
    %77 = vmatprep.subr.mxu0 0.0
    %78 = vmatpush1.msra.mxu0 0.0
    %79 = vmatprep.subr.mxu0 0.0
    %80 = vmatpush1.msra.mxu0 0.0
    %81 = vmatprep.subr.mxu0 0.0
    %82 = vmatpush1.msra.mxu0 0.0
    %83 = vmatprep.subr.mxu0 0.0
    %84 = vmatpush1.msra.mxu0 0.0
    %85 = vmatprep.subr.mxu0 0.0
    %86 = vmatpush1.msra.mxu0 0.0
    %87 = vmatprep.subr.mxu0 0.0
    %88 = vmatpush1.msra.mxu0 0.0
    %89 = vmatprep.subr.mxu0 0.0
    %90 = vmatpush1.msra.mxu0 %v53
    %91 = vmatprep.subr.mxu0 0.0
    %92 = vmatpush1.msra.mxu0 %v52
    %93 = vmatprep.subr.mxu0 0.0
    %94 = vmatpush1.msra.mxu0 %v51
    %95 = vmatprep.subr.mxu0 0.0
    %96 = vmatpush1.msra.mxu0 %v50
    %97 = vmatprep.subr.mxu0 0.0
    %98 = vmatpush2.msra.mxu0 0.0
    %99 = vmatprep.subr.mxu0 0.0
    %100 = vmatpush2.msra.mxu0 0.0
    %101 = vmatprep.subr.mxu0 0.0
    %102 = vmatpush2.msra.mxu0 0.0
    %103 = vmatprep.subr.mxu0 0.0
    %104 = vmatpush2.msra.mxu0 0.0
    %105 = vmatprep.subr.mxu0 0.0
    %106 = vmatpush2.msra.mxu0 0.0
    %107 = vmatprep.subr.mxu0 0.0
    %108 = vmatpush2.msra.mxu0 0.0
    %109 = vmatprep.subr.mxu0 0.0
    %110 = vmatpush2.msra.mxu0 0.0
    %111 = vmatprep.subr.mxu0 0.0
    %112 = vmatpush2.msra.mxu0 0.0
    %113 = vmatprep.subr.mxu0 0.0
    %114 = vmatpush2.msra.mxu0 0.0
    %115 = vmatprep.subr.mxu0 0.0
    %116 = vmatpush2.msra.mxu0 0.0
    %117 = vmatprep.subr.mxu0 0.0
    %118 = vmatpush2.msra.mxu0 0.0
    %119 = vmatprep.subr.mxu0 0.0
    %120 = vmatpush2.msra.mxu0 0.0
    %121 = vmatprep.subr.mxu0 0.0
    %122 = vmatpush2.msra.mxu0 0.0
    %123 = vmatprep.subr.mxu0 0.0
    %124 = vmatpush2.msra.mxu0 0.0
    %125 = vmatprep.subr.mxu0 0.0
    %126 = vmatpush2.msra.mxu0 0.0
    %127 = vmatprep.subr.mxu0 0.0
    %128 = vmatpush2.msra.mxu0 0.0
    %129 = vmatprep.mubr.f32.mxu0 0.0
    %130 = vmatmul.mubr.f32.gmra.mxu0 %v63
    %v131 = vpop.f32.mrf.mxu0
    %v132 = vadd.f32 %v59, %v131
    %v133 = vpop.f32.mrf.mxu0
    %134 = vdwg.mxu0
    %v135 = vmax.f32 %v132, 0.0
    %v136 = vld [vmem:[%s3] sm:$0x1]
    %v138 = vlaneseq
    %v139 = vshrl.u32 %v138, 7
    %v140 = vsub.s32 0, %v139
    %v141 = vrot.slane %v136, %v140
    %v143 = vmul.f32 %v135, %v141
    %144 = vadd.xlane.f32.xlu0 %v143
    %v145 = vpop.xlane.xlu0 %144
    %v146 = vld [vmem:[#allocation2] sm:$0x1]
    %148 = vset.pattern.permute.xlu0 0
    %149 = vperm.xlu0 %148, %v146
    %v150 = vpop.permute.xlu0 %149
    %v152 = vlaneseq
    %v153 = vshrl.u32 %v152, 7
    %v154 = vsub.s32 0, %v153
    %v155 = vrot.slane %v150, %v154
    %v156 = vadd.f32 %v145, %v155
    %v158 = vlaneseq
    %v159 = vand.u32 %v158, 127
    %v160 = vlaneseq
    %v161 = vshrl.u32 %v160, 7
    %v162 = vsub.s32 %v159, %v161
    %v163 = vrot.slane %v156, %v162
    %vm165 = vcmask 57344
    %166 = vst.msk [vmem:[#allocation8] sm:$0x1] %vm165, %v163
    // Predicated region
    $region30: #{tpu_custom_call.1} parent=1 // pred_check
      _
    $region31: #{tpu_custom_call.1} parent=1 // pred_check_branch
      %168 = sbr.rel (0) target = $region33
    $region32: #{tpu_custom_call.1} parent=1 // pred_region
      %s170 = ssub.s32 16, 16
      %171 = vsyncadd [#allocation5], %s170
      %s173 = sshll.u32 [#allocation8], 4
      %s174 = int_to_ptr.vmem [resolvable:$true] %s173
      %176 = dma.vmem_to_hbm [thread:$0]  %s174, 16, %s5, [#allocation5]
    $region33: #{tpu_custom_call.1} parent=1 // pred_fallthru
      _
    // Predicated region
    $region34: #{tpu_custom_call.1} parent=1 // pred_check
      _
    $region35: #{tpu_custom_call.1} parent=1 // pred_check_branch
      %178 = sbr.rel (0) target = $region37
    $region36: #{tpu_custom_call.1} parent=1 // pred_region
      %179 = dma.done [#allocation5], 16
    $region37: #{tpu_custom_call.1} parent=1 // pred_fallthru
      _
    %180 = vsyncpa [#allocation4], 1
    %181 = vsyncpa [#allocation7], 1
    %182 = vsyncpa [#allocation5], 1

</llo_original>
